<compile_context>
chip_gen: v5e
topology: v5e:2x2
jax: 0.10.0
libtpu: 0.0.40
codegen_flags: <defaults>
</compile_context>

<pallas_src>
import jax
import jax.numpy as jnp
from jax.experimental import pallas as pl
from jax.experimental.pallas import tpu as pltpu


def _dma_copy_kernel(x_hbm, o_hbm, sem):
    # One direct HBM->HBM DMA of the whole (already output-shaped) array.
    # No VMEM staging, no vreg traffic, no grid.
    cp = pltpu.make_async_copy(x_hbm, o_hbm, sem)
    cp.start()
    cp.wait()


def pixel_shuffle(x, upscale_factor=2):
    # `upscale_factor` kept for API parity; like the PyTorch forward, the
    # reshape is hard-coded to (N, C // 2, 2 * W).
    del upscale_factor
    N, C, W = x.shape
    assert C % 2 == 0, "channel dim must be even (forward does C // 2)"
    out_shape = (N, C // 2, 2 * W)

    # Metadata-only contiguous reshape so src and dst refs have identical
    # shapes; the kernel is then a straight byte-for-byte DMA.
    x_view = jnp.reshape(x, out_shape)

    itemsize = jnp.dtype(x.dtype).itemsize
    total = N * C * W

    return pl.pallas_call(
        _dma_copy_kernel,
        out_shape=jax.ShapeDtypeStruct(out_shape, x.dtype),
        in_specs=[pl.BlockSpec(memory_space=pl.ANY)],    # raw HBM ref, no auto-DMA
        out_specs=pl.BlockSpec(memory_space=pl.ANY),     # raw HBM ref, no auto-DMA
        scratch_shapes=[pltpu.SemaphoreType.DMA(())],
        cost_estimate=pl.CostEstimate(
            flops=0,
            transcendentals=0,
            bytes_accessed=2 * total * itemsize,
        ),
    )(x_view)


if __name__ == "__main__":
    key = jax.random.PRNGKey(0)

    # Small 3-D input consistent with the forward's (N, C, W) expectation.
    x = jax.random.normal(key, (2, 4, 16), dtype=jnp.float32)
    out = jax.block_until_ready(pixel_shuffle(x))
    ref = x.reshape(2, 2, 32)                     # contiguous .view == reshape
    assert out.shape == (2, 2, 32), out.shape
    assert out.dtype == x.dtype
    assert jnp.array_equal(out, ref), "mismatch vs reference reshape (f32)"

    # Awkward shape (total not divisible by 128) — previously the degenerate
    # (1, total) fallback; trivially handled by the HBM->HBM DMA path.
    x2 = jax.random.normal(jax.random.PRNGKey(1), (3, 6, 10), dtype=jnp.float32)
    out2 = jax.block_until_ready(pixel_shuffle(x2))
    assert jnp.array_equal(out2, x2.reshape(3, 3, 20)), "mismatch (odd shape)"

    # bf16 path (no sublane-packing concerns since nothing is staged in VMEM).
    x3 = jax.random.normal(jax.random.PRNGKey(2), (4, 32, 64)).astype(jnp.bfloat16)
    out3 = jax.block_until_ready(pixel_shuffle(x3))
    assert out3.dtype == jnp.bfloat16
    assert jnp.array_equal(out3, x3.reshape(4, 16, 128)), "mismatch (bf16)"

    print("KERNEL_OK")
</pallas_src>

<mosaic_0001>
module attributes {stable_mosaic.version = 11 : i64} {
  func.func @_dma_copy_kernel(%arg0: memref<2x2x32xf32, #tpu.memory_space<any>>, %arg1: memref<2x2x32xf32, #tpu.memory_space<any>>, %arg2: memref<!tpu.dma_semaphore, #tpu.memory_space<semaphore_mem>>) attributes {dimension_semantics = [], scalar_prefetch = 0 : i64, scratch_operands = 1 : i64, tpu.core_type = #tpu.core_type<tc>} {
    tpu.enqueue_dma source(%arg0 : memref<2x2x32xf32, #tpu.memory_space<any>>) target(%arg1 : memref<2x2x32xf32, #tpu.memory_space<any>>) target_semaphore(%arg2 : memref<!tpu.dma_semaphore, #tpu.memory_space<semaphore_mem>>)
    tpu.wait_dma2 semaphore(%arg2 : memref<!tpu.dma_semaphore, #tpu.memory_space<semaphore_mem>>) src(%arg0 : memref<2x2x32xf32, #tpu.memory_space<any>>) dst(%arg1 : memref<2x2x32xf32, #tpu.memory_space<any>>)
    return
  }
}

</mosaic_0001>

<llo_original>
// kernel: tpu_custom_call.1
$region0: #{tpu_custom_call.1}
  #allocation0 [shape = 'u32[]', space=smem, size = 0x4, offset = 0x4, fixed_abs, tag = 'smem constant byte address 0x4 - core index']
  #allocation1 [shape = 'u32[72,128]{1,0:T(1,128)}', space=vmem, size = 0x9000, scoped, tag = 'internal scratch']
  #allocation2 [shape = 's32[1]{0}', space=sflag, size = 0x4, scoped, tag = 'scratch operand']
  #allocation3 [shape = 's32[]', space=sflag, size = 0x4, offset = 0, fixed_abs, tag = 'sflag constant byte address 0x0 - dummy sync flag']
  #allocation4 [shape = 'u32[0]{0}', space=smem, size = 0, offset = 0, fixed_abs, tag = 'smem constant byte address 0x0 - null']
  %s0 = inlined_call_operand.hbm [shape: f32[2,2,32], index: 0, kind: input, shape index: {}]
  %s1 = inlined_call_operand.hbm [shape: f32[2,2,32], index: 1, kind: output, shape index: {}]
  %s2 = sld [smem:[#allocation0]]
  $region2: #{tpu_custom_call.1} parent=0
    _
  %s4 = ssub.s32 1, %s2
  %s5 = scalar_select 0, %s4, %s2
  %s7 = sshll.u32 1, 14
  %s8 = sxor.u32 4294967295, %s7
  %s10 = sshll.u32 %s0, 4
  %s11 = int_to_ptr.hbm [resolvable:$true] %s10
  %s12 = sshll.u32 %s1, 4
  %s13 = int_to_ptr.hbm [resolvable:$true] %s12
  %16 = dma.general %s11, 64, %s13, [#allocation2], [#allocation3], [#allocation4], 0, 0
  %s17 = smul.u32 2, 2
  %s18 = smul.u32 %s17, 1
  %s19 = sshll.u32 %s18, 4
  %20 = dma.done [#allocation2], %s19
  %21 = vsyncmov [#allocation2]
  %s22 = vpop.sfrf %21
  %p23 = scmp.eq.s32.totalorder %s22, 0
  %p24 = pneg %p23
  %26 = shalt.err (%p24)

</llo_original>
